<compile_context>
chip_gen: v7x
topology: tpu7x:2x2x1
jax: 0.10.0
libtpu: 0.0.40
codegen_flags: <defaults>
</compile_context>

<pallas_src>
import functools

import jax
import jax.numpy as jnp
from jax.experimental import pallas as pl
from jax.experimental.pallas import tpu as pltpu


def _round_up(n, m):
    return ((n + m - 1) // m) * m


def perceptron_kernel(params_ref, x_ref, o_ref):
    # params_ref: SMEM (4,)  f32 = [w0, w1, w2, bias]
    # x_ref:      VMEM (3, tile_rows, 128) f32  (feature, batch-row, batch-lane)
    # o_ref:      VMEM (tile_rows, 128)   f32
    w0 = params_ref[0]
    w1 = params_ref[1]
    w2 = params_ref[2]
    b = params_ref[3]
    # Pure VPU math on fully dense vregs: 3 scalar-broadcast multiplies + adds.
    z = x_ref[0] * w0 + x_ref[1] * w1 + x_ref[2] * w2 + b
    # sigmoid(z) == 0.5 * (tanh(z/2) + 1): single EUP op, no divide on the VALU.
    o_ref[...] = 0.5 * (jnp.tanh(0.5 * z) + 1.0)


def _pick_tile_rows(rows):
    if rows <= 8:
        # One block whose dims equal the full array dims (always a legal block).
        return rows
    # >= 2 grid steps (v7x megacore sharding) capped at 512 rows per step
    # (= 65536 samples, ~1.6 MiB of double-buffered VMEM — tiny on all gens).
    tr = min(512, _round_up(pl.cdiv(rows, 2), 8))
    return min(tr, rows)


@functools.partial(jax.jit, static_argnames=("tile_rows",))
def perceptron_forward(x, weight, bias, *, tile_rows=None):
    """x: (B, 3) f32, weight: (1, 3) f32 (PyTorch layout), bias: (1,) f32.

    Returns sigmoid(x @ weight.T + bias) with shape (B, 1).
    """
    B, in_features = x.shape
    assert in_features == 3 and weight.shape == (1, 3) and bias.shape == (1,)
    if B == 0:
        return jnp.zeros((0, 1), jnp.float32)

    b_pad = _round_up(B, 128)          # pad to the lane width only (<=127 extra)
    rows = b_pad // 128                # batch rows (sublane axis)

    if tile_rows is None:
        tile_rows = _pick_tile_rows(rows)
    else:
        tile_rows = min(tile_rows, rows)
        if tile_rows < rows:
            tile_rows = max(8, (tile_rows // 8) * 8)
    n_tiles = pl.cdiv(rows, tile_rows)

    # Feature-major, batch packed into (rows, 128). Pad + transpose fuse into
    # one XLA pass under this jit; the trailing reshape is layout-free.
    x_fm = jnp.pad(x.astype(jnp.float32), ((0, b_pad - B), (0, 0)))
    x_fm = x_fm.T.reshape(in_features, rows, 128)

    # Pack [w0, w1, w2, b] for the SMEM scalar path.
    params = jnp.concatenate(
        [weight.reshape(-1), bias.reshape(-1)]).astype(jnp.float32)  # (4,)

    out = pl.pallas_call(
        perceptron_kernel,
        out_shape=jax.ShapeDtypeStruct((rows, 128), jnp.float32),
        grid_spec=pltpu.PrefetchScalarGridSpec(
            num_scalar_prefetch=0,
            grid=(n_tiles,),
            in_specs=[
                # Whole (4,) parameter vector resident in SMEM for all steps.
                pl.BlockSpec(memory_space=pltpu.MemorySpace.SMEM),
                # Fully dense (3, tile_rows, 128) input block.
                pl.BlockSpec((in_features, tile_rows, 128),
                             lambda i: (0, i, 0)),
            ],
            out_specs=pl.BlockSpec((tile_rows, 128), lambda i: (i, 0)),
        ),
        compiler_params=pltpu.CompilerParams(
            dimension_semantics=("parallel",),
        ),
    )(params, x_fm)

    # Restore the module's (B, 1) contract.  (If the consumer accepts a flat
    # (B,) vector, return out.reshape(-1)[:B] directly to skip this last copy.)
    return out.reshape(-1)[:B].reshape(B, 1)


if __name__ == "__main__":
    key = jax.random.PRNGKey(0)
    k_x, k_w, k_b, k_x2 = jax.random.split(key, 4)

    batch, in_features, out_features = 8, 3, 1

    # Deterministic "parameter init" mimicking torch.nn.Linear's uniform
    # U(-1/sqrt(fan_in), 1/sqrt(fan_in)) range.
    bound = 1.0 / jnp.sqrt(jnp.float32(in_features))
    weight = jax.random.uniform(
        k_w, (out_features, in_features), jnp.float32, -bound, bound
    )  # PyTorch layout (out, in)
    bias = jax.random.uniform(
        k_b, (out_features,), jnp.float32, -bound, bound
    )

    # Small-shape run (single block path).
    x = jax.random.normal(k_x, (batch, in_features), jnp.float32)
    out = jax.block_until_ready(perceptron_forward(x, weight, bias))
    ref = jax.nn.sigmoid(x @ weight.T + bias)
    assert out.shape == (batch, out_features)
    assert jnp.allclose(out, ref, atol=1e-5), "mismatch vs reference (small batch)"

    # Second run exercising the tiled / boundary-block path (still small).
    x2 = jax.random.normal(k_x2, (2500, in_features), jnp.float32)
    out2 = jax.block_until_ready(perceptron_forward(x2, weight, bias))
    ref2 = jax.nn.sigmoid(x2 @ weight.T + bias)
    assert out2.shape == (2500, out_features)
    assert jnp.allclose(out2, ref2, atol=1e-5), "mismatch vs reference (tiled batch)"

    print("KERNEL_OK")
</pallas_src>

<mosaic_0001>
module attributes {stable_mosaic.version = 11 : i64} {
  func.func @perceptron_kernel(%arg0: i32, %arg1: memref<4xf32, #tpu.memory_space<smem>>, %arg2: memref<3x1x128xf32, #tpu.memory_space<vmem>>, %arg3: memref<1x128xf32, #tpu.memory_space<vmem>>) attributes {dimension_semantics = [#tpu.dimension_semantics<parallel>], iteration_bounds = array<i64: 1>, scalar_prefetch = 0 : i64, scratch_operands = 0 : i64, tpu.core_type = #tpu.core_type<tc>, window_params = [{transform_indices = @transform_0, window_bounds = array<i64: 4>}, {transform_indices = @transform_1, window_bounds = array<i64: 3, 1, 128>}, {transform_indices = @transform_2, window_bounds = array<i64: 1, 128>}]} {
    %c0 = arith.constant 0 : index
    %0 = memref.load %arg1[%c0] : memref<4xf32, #tpu.memory_space<smem>>
    %c1 = arith.constant 1 : index
    %1 = memref.load %arg1[%c1] : memref<4xf32, #tpu.memory_space<smem>>
    %c2 = arith.constant 2 : index
    %2 = memref.load %arg1[%c2] : memref<4xf32, #tpu.memory_space<smem>>
    %c3 = arith.constant 3 : index
    %3 = memref.load %arg1[%c3] : memref<4xf32, #tpu.memory_space<smem>>
    %c0_0 = arith.constant 0 : index
    %c0_1 = arith.constant 0 : index
    %c0_2 = arith.constant 0 : index
    %4 = vector.load %arg2[%c0_0, %c0_1, %c0_2] : memref<3x1x128xf32, #tpu.memory_space<vmem>>, vector<1x1x128xf32>
    %5 = vector.shape_cast %4 : vector<1x1x128xf32> to vector<1x128xf32>
    %6 = vector.broadcast %0 : f32 to vector<1x128xf32>
    %7 = arith.mulf %5, %6 : vector<1x128xf32>
    %c1_3 = arith.constant 1 : index
    %c0_4 = arith.constant 0 : index
    %c0_5 = arith.constant 0 : index
    %8 = vector.load %arg2[%c1_3, %c0_4, %c0_5] : memref<3x1x128xf32, #tpu.memory_space<vmem>>, vector<1x1x128xf32>
    %9 = vector.shape_cast %8 : vector<1x1x128xf32> to vector<1x128xf32>
    %10 = vector.broadcast %1 : f32 to vector<1x128xf32>
    %11 = arith.mulf %9, %10 : vector<1x128xf32>
    %12 = arith.addf %7, %11 : vector<1x128xf32>
    %c2_6 = arith.constant 2 : index
    %c0_7 = arith.constant 0 : index
    %c0_8 = arith.constant 0 : index
    %13 = vector.load %arg2[%c2_6, %c0_7, %c0_8] : memref<3x1x128xf32, #tpu.memory_space<vmem>>, vector<1x1x128xf32>
    %14 = vector.shape_cast %13 : vector<1x1x128xf32> to vector<1x128xf32>
    %15 = vector.broadcast %2 : f32 to vector<1x128xf32>
    %16 = arith.mulf %14, %15 : vector<1x128xf32>
    %17 = arith.addf %12, %16 : vector<1x128xf32>
    %18 = vector.broadcast %3 : f32 to vector<1x128xf32>
    %19 = arith.addf %17, %18 : vector<1x128xf32>
    %cst = arith.constant 5.000000e-01 : f32
    %20 = vector.broadcast %cst : f32 to vector<1x128xf32>
    %21 = arith.mulf %20, %19 : vector<1x128xf32>
    %22 = math.tanh %21 : vector<1x128xf32>
    %cst_9 = arith.constant 1.000000e+00 : f32
    %23 = vector.broadcast %cst_9 : f32 to vector<1x128xf32>
    %24 = arith.addf %22, %23 : vector<1x128xf32>
    %cst_10 = arith.constant 5.000000e-01 : f32
    %25 = vector.broadcast %cst_10 : f32 to vector<1x128xf32>
    %26 = arith.mulf %25, %24 : vector<1x128xf32>
    %c0_11 = arith.constant 0 : index
    %c0_12 = arith.constant 0 : index
    %27 = vector.load %arg3[%c0_11, %c0_12] : memref<1x128xf32, #tpu.memory_space<vmem>>, vector<1x128xf32>
    tpu.vector_store %arg3[%c0_11, %c0_12], %26 {strides = array<i32>} : memref<1x128xf32, #tpu.memory_space<vmem>>, vector<1x128xf32>,
    return
  }
  func.func @transform_0(%arg0: i32) -> i32 {
    %c0_i32 = arith.constant 0 : i32
    %c0_i32_0 = arith.constant 0 : i32
    return %c0_i32 : i32
  }
  func.func @transform_1(%arg0: i32) -> (i32, i32, i32) {
    %c0_i32 = arith.constant 0 : i32
    %c0_i32_0 = arith.constant 0 : i32
    %c0_i32_1 = arith.constant 0 : i32
    return %c0_i32, %arg0, %c0_i32_0 : i32, i32, i32
  }
  func.func @transform_2(%arg0: i32) -> (i32, i32) {
    %c0_i32 = arith.constant 0 : i32
    %c0_i32_0 = arith.constant 0 : i32
    return %arg0, %c0_i32 : i32, i32
  }
}

</mosaic_0001>

<llo_original>
// kernel: perceptron_forward.1
$region0: #{perceptron_forward.1}
  #allocation0 [shape = 'u32[]', space=smem, size = 0x4, offset = 0x4, fixed_abs, tag = 'smem constant byte address 0x4 - core index']
  #allocation1 [shape = 'u32[144,128]{1,0:T(1,128)}', space=vmem, size = 0x12000, scoped, tag = 'internal scratch']
  %s0 = inlined_call_operand.vmem [shape: f32[4], index: 0, kind: input, shape index: {}]
  %s1 = inlined_call_operand.vmem [shape: f32[3,1,128], index: 1, kind: input, shape index: {}]
  %s2 = inlined_call_operand.vmem [shape: f32[1,128], index: 2, kind: output, shape index: {}]
  %s3 = sld [smem:[#allocation0]]
  $region22: #{perceptron_forward.1} parent=0
    _
  %s5 = ssub.s32 1, %s3
  %s6 = scalar_select 0, %s5, %s3
  $region1: #{perceptron_forward.1} parent=0
    #allocation2 [shape = 'u8[512]{0}', space=smem, size = 0x200, scoped, tag = 'input window, operand 0, single buffered']
    #allocation3 [shape = 's32[1]{0}', space=sflag, size = 0x4, scoped, tag = 'scoped memory for perceptron_forward.1']
    %7 = vsyncpa [#allocation3], 0
    // Predicated region
    $region2: #{perceptron_forward.1} parent=1 // pred_check
      _
    $region3: #{perceptron_forward.1} parent=1 // pred_check_branch
      %9 = sbr.rel (0) target = $region5
    $region4: #{perceptron_forward.1} parent=1 // pred_region
      %s11 = ssub.s32 16, 16
      %12 = vsyncadd [#allocation3], %s11
      %s14 = sshll.u32 %s0, 4
      %s15 = int_to_ptr.vmem [resolvable:$true] %s14
      %17 = dma.vmem_to_smem %s15, 16, [#allocation2], [#allocation3]
    $region5: #{perceptron_forward.1} parent=1 // pred_fallthru
      _
    // Predicated region
    $region6: #{perceptron_forward.1} parent=1 // pred_check
      _
    $region7: #{perceptron_forward.1} parent=1 // pred_check_branch
      %19 = sbr.rel (0) target = $region9
    $region8: #{perceptron_forward.1} parent=1 // pred_region
      _
    $region9: #{perceptron_forward.1} parent=1 // pred_fallthru
      _
    // Predicated region
    $region10: #{perceptron_forward.1} parent=1 // pred_check
      _
    $region11: #{perceptron_forward.1} parent=1 // pred_check_branch
      %21 = sbr.rel (0) target = $region13
    $region12: #{perceptron_forward.1} parent=1 // pred_region
      %22 = dma.done [#allocation3], 16
    $region13: #{perceptron_forward.1} parent=1 // pred_fallthru
      _
    %23 = sfence
    %s24 = sld [smem:[#allocation2]]
    %s25 = sld [smem:[#allocation2 + $0x1]]
    %s26 = sld [smem:[#allocation2 + $0x2]]
    %s27 = sld [smem:[#allocation2 + $0x3]]
    %v28 = vld [vmem:[%s1] sm:$0x1]
    %v29 = vstv %s24
    %v30 = vmul.f32 %v28, %v29
    %s31 = scalar_lea.vmem %s1, 1
    %v32 = vld [vmem:[%s31] sm:$0x1]
    %v33 = vstv %s25
    %v34 = vmul.f32 %v32, %v33
    %v35 = vadd.f32 %v30, %v34
    %s36 = scalar_lea.vmem %s1, 2
    %v37 = vld [vmem:[%s36] sm:$0x1]
    %v38 = vstv %s26
    %v39 = vmul.f32 %v37, %v38
    %v40 = vadd.f32 %v35, %v39
    %v41 = vstv %s27
    %v42 = vadd.f32 %v40, %v41
    %v43 = vmul.f32 %v42, 0.5
    %v44 = vtanh.pop %v43
    %v45 = vadd.f32 %v44, 1.0
    %v46 = vmul.f32 %v45, 0.5
    %47 = vst [vmem:[%s2] sm:$0x1] %v46
    // Predicated region
    $region14: #{perceptron_forward.1} parent=1 // pred_check
      _
    $region15: #{perceptron_forward.1} parent=1 // pred_check_branch
      %49 = sbr.rel (0) target = $region17
    $region16: #{perceptron_forward.1} parent=1 // pred_region
      _
    $region17: #{perceptron_forward.1} parent=1 // pred_fallthru
      _
    // Predicated region
    $region18: #{perceptron_forward.1} parent=1 // pred_check
      _
    $region19: #{perceptron_forward.1} parent=1 // pred_check_branch
      %51 = sbr.rel (0) target = $region21
    $region20: #{perceptron_forward.1} parent=1 // pred_region
      _
    $region21: #{perceptron_forward.1} parent=1 // pred_fallthru
      _
    %52 = vsyncpa [#allocation3], 1

</llo_original>
